<compile_context>
chip_gen: v7x
topology: tpu7x:2x2x1
jax: 0.10.0
libtpu: 0.0.40
codegen_flags: <defaults>
</compile_context>

<pallas_src>
import math

import jax
import jax.numpy as jnp
from jax.experimental import pallas as pl
from jax.experimental.pallas import tpu as pltpu

LANE = 128
SUB = 16  # batch-row granularity, safe for bf16 (16) and f32 (8) sublane packing


def _round_up(x: int, m: int) -> int:
    return ((x + m - 1) // m) * m


# ---------------------------------------------------------------------------
# Kernels
# ---------------------------------------------------------------------------
def _expert_kernel_resident(x_ref, w1_ref, b1_ref, w2_ref, b2_ref, o_ref):
    """grid = (batch_tiles,). Weight/bias BlockSpecs have constant index maps,
    so they are DMA'd once and stay VMEM-resident across all batch tiles."""
    h = jnp.dot(x_ref[...], w1_ref[...], preferred_element_type=jnp.float32)
    h = jnp.maximum(h + b1_ref[...], 0.0)
    o = jnp.dot(h.astype(w2_ref.dtype), w2_ref[...],
                preferred_element_type=jnp.float32)
    o_ref[...] = (o + b2_ref[...]).astype(o_ref.dtype)


def _expert_kernel_streamed(x_ref, w1_ref, b1_ref, w2_ref, b2_ref, o_ref, acc_ref):
    """grid = (batch_tiles, hidden_tiles). Hidden axis is a reduction into acc_ref.
    The output bias is folded into the first chunk (no zeros-init, no final add)."""
    j = pl.program_id(1)

    h = jnp.dot(x_ref[...], w1_ref[...], preferred_element_type=jnp.float32)
    h = jnp.maximum(h + b1_ref[...], 0.0)
    contrib = jnp.dot(h.astype(w2_ref.dtype), w2_ref[...],
                      preferred_element_type=jnp.float32)

    @pl.when(j == 0)
    def _first():
        acc_ref[...] = contrib + b2_ref[...]

    @pl.when(j > 0)
    def _rest():
        acc_ref[...] += contrib

    @pl.when(j == pl.num_programs(1) - 1)
    def _finalize():
        o_ref[...] = acc_ref[...].astype(o_ref.dtype)


# ---------------------------------------------------------------------------
# Planning (generation-aware tile / VMEM sizing)
# ---------------------------------------------------------------------------
def _device_info():
    kind = ""
    try:
        kind = (jax.devices()[0].device_kind or "").lower()
    except Exception:
        pass
    cap = None
    try:
        info = pltpu.get_tpu_info()
        cap = getattr(info, "vmem_capacity_bytes", None)
        cap = int(cap) if cap else None
    except Exception:
        cap = None
    if not cap:
        cap = 64 * 2**20 if "v7" in kind else 128 * 2**20
    return kind, cap


def _resident_footprint(block_b, hidden_p, code_p, out_p, cbytes, obytes):
    return (2 * block_b * code_p * cbytes          # x tiles (double-buffered)
            + 2 * code_p * hidden_p * cbytes       # W1 (budget 2x even if resident)
            + 2 * 8 * hidden_p * 4                 # b1 (sublane-padded f32)
            + 2 * hidden_p * out_p * cbytes        # W2
            + 2 * 8 * out_p * 4                    # b2
            + 2 * block_b * out_p * obytes         # output tiles
            + block_b * hidden_p * 4               # h (f32)
            + block_b * hidden_p * cbytes          # h cast to compute dtype
            + block_b * out_p * 4)                 # o before bias/cast


def _streamed_footprint(block_b, block_h, code_p, out_p, cbytes, obytes):
    return (2 * block_b * code_p * cbytes
            + 2 * code_p * block_h * cbytes
            + 2 * 8 * block_h * 4
            + 2 * block_h * out_p * cbytes
            + 2 * 8 * out_p * 4
            + 2 * block_b * out_p * obytes
            + block_b * out_p * 4                  # accumulator scratch
            + block_b * block_h * 4                # h (f32)
            + block_b * block_h * cbytes           # h cast to compute dtype
            + block_b * out_p * 4)                 # contrib


def plan_expert(B, code_size, hidden_size, output_size, *,
                compute_dtype=jnp.bfloat16, out_dtype=jnp.float32):
    kind, vmem_cap = _device_info()
    mxu_align = 128 if "v5" in kind else 256
    two_tc = "v7" in kind

    # Generation-aware VMEM request ceiling (headroom for compiler internal scratch).
    if vmem_cap <= 64 * 2**20:                       # v7x: 64 MiB / TC
        budget = int(vmem_cap * 0.82)
    else:                                            # v5e / v6e: 128 MiB
        budget = min(int(vmem_cap * 0.85), 112 * 2**20)

    cbytes = jnp.dtype(compute_dtype).itemsize
    obytes = jnp.dtype(out_dtype).itemsize

    code_p = _round_up(code_size, LANE)
    out_p = _round_up(output_size, LANE)
    hidden_lane = _round_up(hidden_size, LANE)

    # ---- batch tile: minimize padding, multiple of 16, <= 512 ----
    n_tiles = max(1, math.ceil(B / 512))
    block_b = _round_up(math.ceil(B / n_tiles), SUB)
    if two_tc and math.ceil(B / block_b) < 2 and block_b > SUB:
        block_b = _round_up(math.ceil(block_b / 2), SUB)   # keep both TensorCores busy

    bb_cands = [block_b]
    bb = block_b
    while bb > 128:
        bb = max(128, _round_up(math.ceil(bb / 2), SUB))
        if bb != bb_cands[-1]:
            bb_cands.append(bb)

    # ---- hidden tiling candidates (pad hidden UP to a multiple of block_h) ----
    h_align = mxu_align if hidden_lane >= mxu_align else LANE
    max_h = _round_up(hidden_lane, h_align)
    h_cands = [c for c in (4096, 2048, 1024, 512, 256, 128)
               if c % h_align == 0 and c <= max_h]
    if not h_cands:
        h_cands = [max_h]

    resident = False
    block_h = None
    hidden_p = hidden_lane

    # Prefer keeping all weights VMEM-resident (shrinking block_b down to 128 if needed).
    for bb in bb_cands:
        if _resident_footprint(bb, hidden_lane, code_p, out_p, cbytes, obytes) <= budget:
            resident = True
            block_b = bb
            block_h = hidden_lane
            hidden_p = hidden_lane
            break

    if not resident:
        search_bb = list(bb_cands)
        bb = search_bb[-1]
        while bb > SUB:
            bb = max(SUB, _round_up(math.ceil(bb / 2), SUB))
            if bb != search_bb[-1]:
                search_bb.append(bb)
        chosen = None
        for bb in search_bb:                       # prefer large batch tiles first
            for ch in h_cands:                     # then large hidden chunks
                if _streamed_footprint(bb, ch, code_p, out_p, cbytes, obytes) <= budget:
                    chosen = (bb, ch)
                    break
            if chosen is not None:
                break
        if chosen is None:                         # budget is advisory; take smallest tiles
            chosen = (search_bb[-1], h_cands[-1])
        block_b, block_h = chosen
        hidden_p = _round_up(hidden_lane, block_h)

    B_p = _round_up(B, block_b)

    if resident:
        fp = _resident_footprint(block_b, hidden_p, code_p, out_p, cbytes, obytes)
    else:
        fp = _streamed_footprint(block_b, block_h, code_p, out_p, cbytes, obytes)
    vmem_limit = int(min(max(int(fp * 1.25) + (2 << 20), 32 << 20),
                         int(vmem_cap * 0.9)))

    return dict(B=B, B_p=B_p, block_b=block_b, block_h=block_h,
                code_p=code_p, hidden_p=hidden_p, out_p=out_p,
                output_size=output_size, resident=resident,
                vmem_limit=vmem_limit,
                compute_dtype=compute_dtype, out_dtype=out_dtype)


# ---------------------------------------------------------------------------
# Padding helpers (zero padding preserves the math exactly)
# ---------------------------------------------------------------------------
def _pad_to(a, shape, dtype):
    shape = tuple(shape)
    if a.shape == shape and a.dtype == jnp.dtype(dtype):
        return a                                   # no copy at all
    if a.shape == shape:
        return a.astype(dtype)                     # cast only
    out = jnp.zeros(shape, dtype)
    return out.at[tuple(slice(0, s) for s in a.shape)].set(a.astype(dtype))


def prepare_expert_weights(w1, b1, w2, b2, plan):
    """Pad/cast weights once (hoist out of the per-call path)."""
    cd = plan["compute_dtype"]
    w1p = _pad_to(w1, (plan["code_p"], plan["hidden_p"]), cd)
    b1p = _pad_to(b1.reshape(1, -1), (1, plan["hidden_p"]), jnp.float32)
    w2p = _pad_to(w2, (plan["hidden_p"], plan["out_p"]), cd)
    b2p = _pad_to(b2.reshape(1, -1), (1, plan["out_p"]), jnp.float32)
    return w1p, b1p, w2p, b2p


# ---------------------------------------------------------------------------
# pallas_call builders / forward
# ---------------------------------------------------------------------------
def _expert_call(plan):
    B_p, code_p = plan["B_p"], plan["code_p"]
    hidden_p, out_p = plan["hidden_p"], plan["out_p"]
    block_b, block_h = plan["block_b"], plan["block_h"]
    out_dtype = plan["out_dtype"]
    cbytes = jnp.dtype(plan["compute_dtype"]).itemsize
    obytes = jnp.dtype(out_dtype).itemsize

    flops = 2 * B_p * (code_p * hidden_p + hidden_p * out_p)
    bytes_accessed = (B_p * code_p * cbytes + code_p * hidden_p * cbytes
                      + hidden_p * 4 + hidden_p * out_p * cbytes + out_p * 4
                      + B_p * out_p * obytes)
    cost = pl.CostEstimate(flops=int(flops), transcendentals=0,
                           bytes_accessed=int(bytes_accessed))

    if plan["resident"]:
        grid = (B_p // block_b,)
        in_specs = [
            pl.BlockSpec((block_b, code_p), lambda i: (i, 0)),      # x
            pl.BlockSpec((code_p, hidden_p), lambda i: (0, 0)),     # W1 (resident)
            pl.BlockSpec((1, hidden_p), lambda i: (0, 0)),          # b1 (resident)
            pl.BlockSpec((hidden_p, out_p), lambda i: (0, 0)),      # W2 (resident)
            pl.BlockSpec((1, out_p), lambda i: (0, 0)),             # b2 (resident)
        ]
        out_specs = pl.BlockSpec((block_b, out_p), lambda i: (i, 0))
        scratch = []
        kernel = _expert_kernel_resident
        dims = ("parallel",)
    else:
        grid = (B_p // block_b, hidden_p // block_h)
        in_specs = [
            pl.BlockSpec((block_b, code_p), lambda i, j: (i, 0)),   # x
            pl.BlockSpec((code_p, block_h), lambda i, j: (0, j)),   # W1 chunk
            pl.BlockSpec((1, block_h), lambda i, j: (0, j)),        # b1 chunk
            pl.BlockSpec((block_h, out_p), lambda i, j: (j, 0)),    # W2 chunk
            pl.BlockSpec((1, out_p), lambda i, j: (0, 0)),          # b2
        ]
        out_specs = pl.BlockSpec((block_b, out_p), lambda i, j: (i, 0))
        scratch = [pltpu.VMEM((block_b, out_p), jnp.float32)]
        kernel = _expert_kernel_streamed
        dims = ("parallel", "arbitrary")

    return pl.pallas_call(
        kernel,
        out_shape=jax.ShapeDtypeStruct((B_p, out_p), out_dtype),
        grid_spec=pltpu.PrefetchScalarGridSpec(
            num_scalar_prefetch=0,
            grid=grid,
            in_specs=in_specs,
            out_specs=out_specs,
            scratch_shapes=scratch),
        compiler_params=pltpu.CompilerParams(
            dimension_semantics=dims,
            vmem_limit_bytes=plan["vmem_limit"]),
        cost_estimate=cost,
    )


def expert_forward_prepadded(x, w1p, b1p, w2p, b2p, plan):
    B = x.shape[0]
    xp = _pad_to(x, (plan["B_p"], plan["code_p"]), plan["compute_dtype"])
    out_padded = _expert_call(plan)(xp, w1p, b1p, w2p, b2p)
    return out_padded[:B, :plan["output_size"]]


def expert_forward(x, w1, b1, w2, b2, *, compute_dtype=jnp.bfloat16,
                   out_dtype=jnp.float32, force_block_h=None):
    """One-shot forward (plans + pads per call). For repeated calls with fixed
    weights, prefer make_expert_forward() which hoists the weight prep."""
    B, code_size = x.shape
    hidden_size = w1.shape[1]
    output_size = w2.shape[1]
    plan = plan_expert(B, code_size, hidden_size, output_size,
                       compute_dtype=compute_dtype, out_dtype=out_dtype)
    if force_block_h is not None:                  # test hook: force streamed path
        plan = dict(plan)
        plan["resident"] = False
        plan["block_h"] = int(force_block_h)
        plan["hidden_p"] = _round_up(_round_up(hidden_size, LANE), plan["block_h"])
    w1p, b1p, w2p, b2p = prepare_expert_weights(w1, b1, w2, b2, plan)
    return expert_forward_prepadded(x, w1p, b1p, w2p, b2p, plan)


def make_expert_forward(w1, b1, w2, b2, batch_size, *, compute_dtype=jnp.bfloat16,
                        out_dtype=jnp.float32):
    """Pads/casts weights once and returns a jitted x -> y closure."""
    code_size, hidden_size = w1.shape
    output_size = w2.shape[1]
    plan = plan_expert(batch_size, code_size, hidden_size, output_size,
                       compute_dtype=compute_dtype, out_dtype=out_dtype)
    w1p, b1p, w2p, b2p = prepare_expert_weights(w1, b1, w2, b2, plan)

    @jax.jit
    def fwd(x):
        return expert_forward_prepadded(x, w1p, b1p, w2p, b2p, plan)

    return fwd


# ---------------------------------------------------------------------------
# Reference + init
# ---------------------------------------------------------------------------
def init_expert_params(key, code_size, hidden_size, output_size, dtype=jnp.float32):
    """Mimics nn.Linear default init (uniform(+/- 1/sqrt(fan_in)))."""
    k1, k2, k3, k4 = jax.random.split(key, 4)
    bound1 = 1.0 / math.sqrt(code_size)
    bound2 = 1.0 / math.sqrt(hidden_size)
    w1 = jax.random.uniform(k1, (code_size, hidden_size), dtype, -bound1, bound1)
    b1 = jax.random.uniform(k2, (1, hidden_size), dtype, -bound1, bound1)
    w2 = jax.random.uniform(k3, (hidden_size, output_size), dtype, -bound2, bound2)
    b2 = jax.random.uniform(k4, (1, output_size), dtype, -bound2, bound2)
    return w1, b1, w2, b2


def expert_reference_f32(x, w1, b1, w2, b2):
    h = jnp.maximum(x @ w1 + b1, 0.0)
    return h @ w2 + b2


def expert_reference_emulated(x, w1, b1, w2, b2, compute_dtype=jnp.bfloat16):
    """Pure-JAX reference mirroring the kernel's bf16-in / f32-accumulate math."""
    f32 = jnp.float32
    xc = x.astype(compute_dtype).astype(f32)
    w1c = w1.astype(compute_dtype).astype(f32)
    w2c = w2.astype(compute_dtype).astype(f32)
    h = jnp.maximum(xc @ w1c + b1.astype(f32), 0.0)
    h = h.astype(compute_dtype).astype(f32)
    return h @ w2c + b2.astype(f32)


if __name__ == "__main__":
    key = jax.random.PRNGKey(0)
    k_x, k_p = jax.random.split(key)

    # --- Test 1: small shapes, weights-resident path, hoisted weight prep ---
    batch, code_size, hidden_size, output_size = 8, 32, 64, 16
    x = jax.random.normal(k_x, (batch, code_size), dtype=jnp.float32)
    w1, b1, w2, b2 = init_expert_params(k_p, code_size, hidden_size, output_size)

    fwd = make_expert_forward(w1, b1, w2, b2, batch)
    out = jax.block_until_ready(fwd(x))
    assert out.shape == (batch, output_size)
    ref_emu = expert_reference_emulated(x, w1, b1, w2, b2)
    assert jnp.allclose(out, ref_emu, atol=2e-3, rtol=2e-3), "resident: mismatch vs bf16 ref"
    ref_f32 = expert_reference_f32(x, w1, b1, w2, b2)
    assert jnp.allclose(out, ref_f32, atol=1e-1, rtol=1e-1), "resident: mismatch vs f32 ref"

    # --- Test 2: force the streamed (hidden-tiled) reduction path ---
    batch2, code2, hidden2, out2 = 32, 256, 512, 128
    k_x2, k_p2 = jax.random.split(k_p)
    x2 = jax.random.normal(k_x2, (batch2, code2), dtype=jnp.float32)
    w1b, b1b, w2b, b2b = init_expert_params(k_p2, code2, hidden2, out2)
    y2 = jax.block_until_ready(
        expert_forward(x2, w1b, b1b, w2b, b2b, force_block_h=256))
    assert y2.shape == (batch2, out2)
    ref2 = expert_reference_emulated(x2, w1b, b1b, w2b, b2b)
    assert jnp.allclose(y2, ref2, atol=2e-3, rtol=2e-3), "streamed: mismatch vs bf16 ref"

    print("KERNEL_OK")
</pallas_src>

<mosaic_0001>
module attributes {stable_mosaic.version = 11 : i64} {
  func.func @_expert_kernel_resident(%arg0: i32, %arg1: memref<16x128xbf16, #tpu.memory_space<vmem>>, %arg2: memref<128x128xbf16, #tpu.memory_space<vmem>>, %arg3: memref<1x128xf32, #tpu.memory_space<vmem>>, %arg4: memref<128x128xbf16, #tpu.memory_space<vmem>>, %arg5: memref<1x128xf32, #tpu.memory_space<vmem>>, %arg6: memref<16x128xf32, #tpu.memory_space<vmem>>) attributes {dimension_semantics = [#tpu.dimension_semantics<parallel>], iteration_bounds = array<i64: 1>, scalar_prefetch = 0 : i64, scratch_operands = 0 : i64, tpu.core_type = #tpu.core_type<tc>, window_params = [{transform_indices = @transform_0, window_bounds = array<i64: 16, 128>}, {pipeline_mode = #tpu.pipeline_mode<synchronous>, transform_indices = @transform_1, window_bounds = array<i64: 128, 128>}, {pipeline_mode = #tpu.pipeline_mode<synchronous>, transform_indices = @transform_2, window_bounds = array<i64: 1, 128>}, {pipeline_mode = #tpu.pipeline_mode<synchronous>, transform_indices = @transform_3, window_bounds = array<i64: 128, 128>}, {pipeline_mode = #tpu.pipeline_mode<synchronous>, transform_indices = @transform_4, window_bounds = array<i64: 1, 128>}, {transform_indices = @transform_5, window_bounds = array<i64: 16, 128>}]} {
    %c0 = arith.constant 0 : index
    %c0_0 = arith.constant 0 : index
    %0 = vector.load %arg1[%c0, %c0_0] : memref<16x128xbf16, #tpu.memory_space<vmem>>, vector<16x128xbf16>
    %c0_1 = arith.constant 0 : index
    %c0_2 = arith.constant 0 : index
    %1 = vector.load %arg2[%c0_1, %c0_2] : memref<128x128xbf16, #tpu.memory_space<vmem>>, vector<128x128xbf16>
    %cst = arith.constant dense<0.000000e+00> : vector<16x128xf32>
    %2 = tpu.matmul %0, %1, %cst {dimension_numbers = #tpu.dot_dimension_numbers<[1], [0], [0], [1], [0, 0, 1, 1], [], []>} : vector<16x128xbf16>, vector<128x128xbf16>, vector<16x128xf32> -> vector<16x128xf32>
    %c0_3 = arith.constant 0 : index
    %c0_4 = arith.constant 0 : index
    %3 = vector.load %arg3[%c0_3, %c0_4] : memref<1x128xf32, #tpu.memory_space<vmem>>, vector<1x128xf32>
    %4 = vector.broadcast %3 : vector<1x128xf32> to vector<16x128xf32>
    %5 = arith.addf %2, %4 : vector<16x128xf32>
    %cst_5 = arith.constant 0.000000e+00 : f32
    %6 = vector.broadcast %cst_5 : f32 to vector<16x128xf32>
    %7 = arith.maximumf %5, %6 : vector<16x128xf32>
    %8 = arith.truncf %7 : vector<16x128xf32> to vector<16x128xbf16>
    %c0_6 = arith.constant 0 : index
    %c0_7 = arith.constant 0 : index
    %9 = vector.load %arg4[%c0_6, %c0_7] : memref<128x128xbf16, #tpu.memory_space<vmem>>, vector<128x128xbf16>
    %cst_8 = arith.constant dense<0.000000e+00> : vector<16x128xf32>
    %10 = tpu.matmul %8, %9, %cst_8 {dimension_numbers = #tpu.dot_dimension_numbers<[1], [0], [0], [1], [0, 0, 1, 1], [], []>} : vector<16x128xbf16>, vector<128x128xbf16>, vector<16x128xf32> -> vector<16x128xf32>
    %c0_9 = arith.constant 0 : index
    %c0_10 = arith.constant 0 : index
    %11 = vector.load %arg5[%c0_9, %c0_10] : memref<1x128xf32, #tpu.memory_space<vmem>>, vector<1x128xf32>
    %12 = vector.broadcast %11 : vector<1x128xf32> to vector<16x128xf32>
    %13 = arith.addf %10, %12 : vector<16x128xf32>
    %c0_11 = arith.constant 0 : index
    %c0_12 = arith.constant 0 : index
    %14 = vector.load %arg6[%c0_11, %c0_12] : memref<16x128xf32, #tpu.memory_space<vmem>>, vector<16x128xf32>
    tpu.vector_store %arg6[%c0_11, %c0_12], %13 {strides = array<i32>} : memref<16x128xf32, #tpu.memory_space<vmem>>, vector<16x128xf32>,
    return
  }
  func.func @transform_0(%arg0: i32) -> (i32, i32) {
    %c0_i32 = arith.constant 0 : i32
    %c0_i32_0 = arith.constant 0 : i32
    return %arg0, %c0_i32 : i32, i32
  }
  func.func @transform_1(%arg0: i32) -> (i32, i32) {
    %c0_i32 = arith.constant 0 : i32
    %c0_i32_0 = arith.constant 0 : i32
    %c0_i32_1 = arith.constant 0 : i32
    return %c0_i32, %c0_i32_0 : i32, i32
  }
  func.func @transform_2(%arg0: i32) -> (i32, i32) {
    %c0_i32 = arith.constant 0 : i32
    %c0_i32_0 = arith.constant 0 : i32
    %c0_i32_1 = arith.constant 0 : i32
    return %c0_i32, %c0_i32_0 : i32, i32
  }
  func.func @transform_3(%arg0: i32) -> (i32, i32) {
    %c0_i32 = arith.constant 0 : i32
    %c0_i32_0 = arith.constant 0 : i32
    %c0_i32_1 = arith.constant 0 : i32
    return %c0_i32, %c0_i32_0 : i32, i32
  }
  func.func @transform_4(%arg0: i32) -> (i32, i32) {
    %c0_i32 = arith.constant 0 : i32
    %c0_i32_0 = arith.constant 0 : i32
    %c0_i32_1 = arith.constant 0 : i32
    return %c0_i32, %c0_i32_0 : i32, i32
  }
  func.func @transform_5(%arg0: i32) -> (i32, i32) {
    %c0_i32 = arith.constant 0 : i32
    %c0_i32_0 = arith.constant 0 : i32
    return %arg0, %c0_i32 : i32, i32
  }
}

</mosaic_0001>

<llo_original>
// kernel: fwd.1
$region0: #{fwd.1}
  #allocation0 [shape = 'u32[]', space=smem, size = 0x4, offset = 0x4, fixed_abs, tag = 'smem constant byte address 0x4 - core index']
  #allocation1 [shape = 'u32[144,128]{1,0:T(1,128)}', space=vmem, size = 0x12000, scoped, tag = 'internal scratch']
  %s0 = inlined_call_operand.vmem [shape: bf16[16,128], index: 0, kind: input, shape index: {}]
  %s1 = inlined_call_operand.hbm [shape: bf16[128,128], index: 1, kind: input, shape index: {}]
  %s2 = inlined_call_operand.vmem [shape: f32[1,128], index: 2, kind: input, shape index: {}]
  %s3 = inlined_call_operand.hbm [shape: bf16[128,128], index: 3, kind: input, shape index: {}]
  %s4 = inlined_call_operand.vmem [shape: f32[1,128], index: 4, kind: input, shape index: {}]
  %s5 = inlined_call_operand.vmem [shape: f32[16,128], index: 5, kind: output, shape index: {}]
  %s6 = sld [smem:[#allocation0]]
  $region38: #{fwd.1} parent=0
    _
  %s8 = ssub.s32 1, %s6
  %s9 = scalar_select 0, %s8, %s6
  $region1: #{fwd.1} parent=0
    #allocation2 [shape = 'u8[32768]{0}', space=vmem, size = 0x8000, scoped, tag = 'input window, operand 1, single buffered']
    #allocation3 [shape = 's32[1]{0}', space=sflag, size = 0x4, scoped, tag = 'scoped memory for fwd.1']
    #allocation4 [shape = 'u8[32768]{0}', space=vmem, size = 0x8000, scoped, tag = 'input window, operand 3, single buffered']
    #allocation5 [shape = 's32[1]{0}', space=sflag, size = 0x4, scoped, tag = 'scoped memory for fwd.1']
    %10 = vsyncpa [#allocation3], 0
    %11 = vsyncpa [#allocation5], 0
    // Predicated region
    $region2: #{fwd.1} parent=1 // pred_check
      _
    $region3: #{fwd.1} parent=1 // pred_check_branch
      %13 = sbr.rel (0) target = $region5
    $region4: #{fwd.1} parent=1 // pred_region
      _
    $region5: #{fwd.1} parent=1 // pred_fallthru
      _
    // Predicated region
    $region6: #{fwd.1} parent=1 // pred_check
      _
    $region7: #{fwd.1} parent=1 // pred_check_branch
      %15 = sbr.rel (0) target = $region9
    $region8: #{fwd.1} parent=1 // pred_region
      %s17 = ssub.s32 1024, 1024
      %18 = vsyncadd [#allocation3], %s17
      %s19 = sshll.u32 [#allocation2], 4
      %s20 = int_to_ptr.vmem [resolvable:$true] %s19
      %25 = dma.hbm_to_vmem [thread:$0]  %s1, 1024, %s20, [#allocation3], 64, 64, 4
    $region9: #{fwd.1} parent=1 // pred_fallthru
      _
    // Predicated region
    $region10: #{fwd.1} parent=1 // pred_check
      _
    $region11: #{fwd.1} parent=1 // pred_check_branch
      %27 = sbr.rel (0) target = $region13
    $region12: #{fwd.1} parent=1 // pred_region
      _
    $region13: #{fwd.1} parent=1 // pred_fallthru
      _
    // Predicated region
    $region14: #{fwd.1} parent=1 // pred_check
      _
    $region15: #{fwd.1} parent=1 // pred_check_branch
      %29 = sbr.rel (0) target = $region17
    $region16: #{fwd.1} parent=1 // pred_region
      %s31 = ssub.s32 1024, 1024
      %32 = vsyncadd [#allocation5], %s31
      %s33 = sshll.u32 [#allocation4], 4
      %s34 = int_to_ptr.vmem [resolvable:$true] %s33
      %39 = dma.hbm_to_vmem [thread:$0]  %s3, 1024, %s34, [#allocation5], 64, 64, 4
    $region17: #{fwd.1} parent=1 // pred_fallthru
      _
    // Predicated region
    $region18: #{fwd.1} parent=1 // pred_check
      _
    $region19: #{fwd.1} parent=1 // pred_check_branch
      %41 = sbr.rel (0) target = $region21
    $region20: #{fwd.1} parent=1 // pred_region
      _
    $region21: #{fwd.1} parent=1 // pred_fallthru
      _
    // Predicated region
    $region22: #{fwd.1} parent=1 // pred_check
      _
    $region23: #{fwd.1} parent=1 // pred_check_branch
      %43 = sbr.rel (0) target = $region25
    $region24: #{fwd.1} parent=1 // pred_region
      %44 = dma.done [#allocation3], 1024
    $region25: #{fwd.1} parent=1 // pred_fallthru
      _
    // Predicated region
    $region26: #{fwd.1} parent=1 // pred_check
      _
    $region27: #{fwd.1} parent=1 // pred_check_branch
      %46 = sbr.rel (0) target = $region29
    $region28: #{fwd.1} parent=1 // pred_region
      %47 = dma.done [#allocation5], 1024
    $region29: #{fwd.1} parent=1 // pred_fallthru
      _
    %v49 = vld [vmem:[%s0] sm:$0xf]
    %v50 = vld [vmem:[%s0 + $0x4] sm:$0xf]
    %v51 = vld [vmem:[#allocation2] sm:$0xf]
    %v52 = vld [vmem:[#allocation2 + $0x4] sm:$0xf]
    %v53 = vld [vmem:[#allocation2 + $0x8] sm:$0xf]
    %v54 = vld [vmem:[#allocation2 + $0xc] sm:$0xf]
    %v55 = vld [vmem:[#allocation2 + $0x10] sm:$0xf]
    %v56 = vld [vmem:[#allocation2 + $0x14] sm:$0xf]
    %v57 = vld [vmem:[#allocation2 + $0x18] sm:$0xf]
    %v58 = vld [vmem:[#allocation2 + $0x1c] sm:$0xf]
    %v59 = vld [vmem:[#allocation2 + $0x20] sm:$0xf]
    %v60 = vld [vmem:[#allocation2 + $0x24] sm:$0xf]
    %v61 = vld [vmem:[#allocation2 + $0x28] sm:$0xf]
    %v62 = vld [vmem:[#allocation2 + $0x2c] sm:$0xf]
    %v63 = vld [vmem:[#allocation2 + $0x30] sm:$0xf]
    %v64 = vld [vmem:[#allocation2 + $0x34] sm:$0xf]
    %v65 = vld [vmem:[#allocation2 + $0x38] sm:$0xf]
    %v66 = vld [vmem:[#allocation2 + $0x3c] sm:$0xf]
    %v67 = vld [vmem:[%s2] sm:$0x1]
    %v69 = vlaneseq
    %v70 = vshrl.u32 %v69, 7
    %v71 = vsub.s32 0, %v70
    %v72 = vrot.slane %v67, %v71
    %v76 = vunpack.c.l.b16 %v49
    %v77 = vunpack.c.l.b16 %v50
    %v78 = vpack.c.b16 %v77, %v76
    %v96 = vunpack.c.l.b16 %v51
    %v97 = vunpack.c.l.b16 %v52
    %v98 = vunpack.c.l.b16 %v53
    %v99 = vunpack.c.l.b16 %v54
    %v100 = vunpack.c.l.b16 %v55
    %v101 = vunpack.c.l.b16 %v56
    %v102 = vunpack.c.l.b16 %v57
    %v103 = vunpack.c.l.b16 %v58
    %v104 = vunpack.c.l.b16 %v59
    %v105 = vunpack.c.l.b16 %v60
    %v106 = vunpack.c.l.b16 %v61
    %v107 = vunpack.c.l.b16 %v62
    %v108 = vunpack.c.l.b16 %v63
    %v109 = vunpack.c.l.b16 %v64
    %v110 = vunpack.c.l.b16 %v65
    %v111 = vunpack.c.l.b16 %v66
    %v112 = vpack.c.b16 %v97, %v96
    %v113 = vpack.c.b16 %v99, %v98
    %v114 = vpack.c.b16 %v101, %v100
    %v115 = vpack.c.b16 %v103, %v102
    %v116 = vpack.c.b16 %v105, %v104
    %v117 = vpack.c.b16 %v107, %v106
    %v118 = vpack.c.b16 %v109, %v108
    %v119 = vpack.c.b16 %v111, %v110
    %128 = vmatprep.subr.bf16.mxu0 0
    %129 = vmatpush1.bf16.msra.mxu0 %v112
    %130 = vmatprep.subr.bf16.mxu0 0
    %131 = vmatpush1.bf16.msra.mxu0 %v113
    %132 = vmatprep.subr.bf16.mxu0 0
    %133 = vmatpush1.bf16.msra.mxu0 %v114
    %134 = vmatprep.subr.bf16.mxu0 0
    %135 = vmatpush1.bf16.msra.mxu0 %v115
    %136 = vmatprep.subr.bf16.mxu0 0
    %137 = vmatpush1.bf16.msra.mxu0 %v116
    %138 = vmatprep.subr.bf16.mxu0 0
    %139 = vmatpush1.bf16.msra.mxu0 %v117
    %140 = vmatprep.subr.bf16.mxu0 0
    %141 = vmatpush1.bf16.msra.mxu0 %v118
    %142 = vmatprep.subr.bf16.mxu0 0
    %143 = vmatpush1.bf16.msra.mxu0 %v119
    %144 = vmatprep.subr.bf16.mxu0 0
    %145 = vmatpush1.bf16.msra.mxu0 0
    %146 = vmatprep.subr.bf16.mxu0 0
    %147 = vmatpush1.bf16.msra.mxu0 0
    %148 = vmatprep.subr.bf16.mxu0 0
    %149 = vmatpush1.bf16.msra.mxu0 0
    %150 = vmatprep.subr.bf16.mxu0 0
    %151 = vmatpush1.bf16.msra.mxu0 0
    %152 = vmatprep.subr.bf16.mxu0 0
    %153 = vmatpush1.bf16.msra.mxu0 0
    %154 = vmatprep.subr.bf16.mxu0 0
    %155 = vmatpush1.bf16.msra.mxu0 0
    %156 = vmatprep.subr.bf16.mxu0 0
    %157 = vmatpush1.bf16.msra.mxu0 0
    %158 = vmatprep.subr.bf16.mxu0 0
    %159 = vmatpush1.bf16.msra.mxu0 0
    %160 = vmatprep.mubr.bf16.mxu0 0
    %161 = vmatmul.mubr.bf16.gmra.mrb[0].mxu0 %v78
    %v162 = vpop.f32.mrb[0].mxu0
    %v163 = vadd.f32 %v72, %v162
    %v164 = vpop.f32.mrb[0].mxu0
    %v165 = vpop.f32.mrb[0].mxu0
    %v166 = vadd.f32 %v72, %v165
    %v167 = vpop.f32.mrb[0].mxu0
    %168 = vdwg.mxu0
    %v169 = vmax.f32 %v163, 0.0
    %v170 = vmax.f32 %v166, 0.0
    %v171 = vpack.c.bf16 %v170, %v169
    %v172 = vld [vmem:[#allocation4] sm:$0xf]
    %v173 = vld [vmem:[#allocation4 + $0x4] sm:$0xf]
    %v174 = vld [vmem:[#allocation4 + $0x8] sm:$0xf]
    %v175 = vld [vmem:[#allocation4 + $0xc] sm:$0xf]
    %v176 = vld [vmem:[#allocation4 + $0x10] sm:$0xf]
    %v177 = vld [vmem:[#allocation4 + $0x14] sm:$0xf]
    %v178 = vld [vmem:[#allocation4 + $0x18] sm:$0xf]
    %v179 = vld [vmem:[#allocation4 + $0x1c] sm:$0xf]
    %v180 = vld [vmem:[#allocation4 + $0x20] sm:$0xf]
    %v181 = vld [vmem:[#allocation4 + $0x24] sm:$0xf]
    %v182 = vld [vmem:[#allocation4 + $0x28] sm:$0xf]
    %v183 = vld [vmem:[#allocation4 + $0x2c] sm:$0xf]
    %v184 = vld [vmem:[#allocation4 + $0x30] sm:$0xf]
    %v185 = vld [vmem:[#allocation4 + $0x34] sm:$0xf]
    %v186 = vld [vmem:[#allocation4 + $0x38] sm:$0xf]
    %v187 = vld [vmem:[#allocation4 + $0x3c] sm:$0xf]
    %v188 = vld [vmem:[%s4] sm:$0x1]
    %v190 = vlaneseq
    %v191 = vshrl.u32 %v190, 7
    %v192 = vsub.s32 0, %v191
    %v193 = vrot.slane %v188, %v192
    %v211 = vunpack.c.l.b16 %v172
    %v212 = vunpack.c.l.b16 %v173
    %v213 = vunpack.c.l.b16 %v174
    %v214 = vunpack.c.l.b16 %v175
    %v215 = vunpack.c.l.b16 %v176
    %v216 = vunpack.c.l.b16 %v177
    %v217 = vunpack.c.l.b16 %v178
    %v218 = vunpack.c.l.b16 %v179
    %v219 = vunpack.c.l.b16 %v180
    %v220 = vunpack.c.l.b16 %v181
    %v221 = vunpack.c.l.b16 %v182
    %v222 = vunpack.c.l.b16 %v183
    %v223 = vunpack.c.l.b16 %v184
    %v224 = vunpack.c.l.b16 %v185
    %v225 = vunpack.c.l.b16 %v186
    %v226 = vunpack.c.l.b16 %v187
    %v227 = vpack.c.b16 %v212, %v211
    %v228 = vpack.c.b16 %v214, %v213
    %v229 = vpack.c.b16 %v216, %v215
    %v230 = vpack.c.b16 %v218, %v217
    %v231 = vpack.c.b16 %v220, %v219
    %v232 = vpack.c.b16 %v222, %v221
    %v233 = vpack.c.b16 %v224, %v223
    %v234 = vpack.c.b16 %v226, %v225
    %243 = vmatprep.subr.bf16.mxu0 0
    %244 = vmatpush1.bf16.msra.mxu0 %v227
    %245 = vmatprep.subr.bf16.mxu0 0
    %246 = vmatpush1.bf16.msra.mxu0 %v228
    %247 = vmatprep.subr.bf16.mxu0 0
    %248 = vmatpush1.bf16.msra.mxu0 %v229
    %249 = vmatprep.subr.bf16.mxu0 0
    %250 = vmatpush1.bf16.msra.mxu0 %v230
    %251 = vmatprep.subr.bf16.mxu0 0
    %252 = vmatpush1.bf16.msra.mxu0 %v231
    %253 = vmatprep.subr.bf16.mxu0 0
    %254 = vmatpush1.bf16.msra.mxu0 %v232
    %255 = vmatprep.subr.bf16.mxu0 0
    %256 = vmatpush1.bf16.msra.mxu0 %v233
    %257 = vmatprep.subr.bf16.mxu0 0
    %258 = vmatpush1.bf16.msra.mxu0 %v234
    %259 = vmatprep.subr.bf16.mxu0 0
    %260 = vmatpush1.bf16.msra.mxu0 0
    %261 = vmatprep.subr.bf16.mxu0 0
    %262 = vmatpush1.bf16.msra.mxu0 0
    %263 = vmatprep.subr.bf16.mxu0 0
    %264 = vmatpush1.bf16.msra.mxu0 0
    %265 = vmatprep.subr.bf16.mxu0 0
    %266 = vmatpush1.bf16.msra.mxu0 0
    %267 = vmatprep.subr.bf16.mxu0 0
    %268 = vmatpush1.bf16.msra.mxu0 0
    %269 = vmatprep.subr.bf16.mxu0 0
    %270 = vmatpush1.bf16.msra.mxu0 0
    %271 = vmatprep.subr.bf16.mxu0 0
    %272 = vmatpush1.bf16.msra.mxu0 0
    %273 = vmatprep.subr.bf16.mxu0 0
    %274 = vmatpush1.bf16.msra.mxu0 0
    %275 = vmatprep.mubr.bf16.mxu0 0
    %276 = vmatmul.mubr.bf16.gmra.mrb[0].mxu0 %v171
    %v277 = vpop.f32.mrb[0].mxu0
    %v278 = vadd.f32 %v193, %v277
    %v279 = vpop.f32.mrb[0].mxu0
    %v280 = vpop.f32.mrb[0].mxu0
    %v281 = vadd.f32 %v193, %v280
    %v282 = vpop.f32.mrb[0].mxu0
    %283 = vdwg.mxu0
    %284 = vst [vmem:[%s5] sm:$0xff] %v278
    %285 = vst [vmem:[%s5 + $0x8] sm:$0xff] %v281
    // Predicated region
    $region30: #{fwd.1} parent=1 // pred_check
      _
    $region31: #{fwd.1} parent=1 // pred_check_branch
      %287 = sbr.rel (0) target = $region33
    $region32: #{fwd.1} parent=1 // pred_region
      _
    $region33: #{fwd.1} parent=1 // pred_fallthru
      _
    // Predicated region
    $region34: #{fwd.1} parent=1 // pred_check
      _
    $region35: #{fwd.1} parent=1 // pred_check_branch
      %289 = sbr.rel (0) target = $region37
    $region36: #{fwd.1} parent=1 // pred_region
      _
    $region37: #{fwd.1} parent=1 // pred_fallthru
      _
    %290 = vsyncpa [#allocation3], 1
    %291 = vsyncpa [#allocation5], 1

</llo_original>
